<compile_context>
chip_gen: v7x
topology: tpu7x:2x2x1
jax: 0.10.0
libtpu: 0.0.40
codegen_flags: <defaults>
</compile_context>

<pallas_src>
import jax
import jax.numpy as jnp
from jax.experimental import pallas as pl
from jax.experimental.pallas import tpu as pltpu


def _make_kernel(inv_temperature, tile_rows, batch, use_bf16_matmul):
    # All closed-over values are plain Python scalars (NOT jnp arrays) so the
    # kernel does not capture traced constants.
    inv_t = float(inv_temperature)
    tile_rows = int(tile_rows)
    batch = int(batch)
    use_bf16_matmul = bool(use_bf16_matmul)

    def kernel(student_ref, teacher_ref, anchors_ref, out_ref):
        i = pl.program_id(0)

        # --- softmax(student / T), kept unnormalized through the matmul ---
        s = student_ref[...].astype(jnp.float32) * inv_t
        s_max = jnp.max(s, axis=1, keepdims=True)
        e = jnp.exp(s - s_max)                               # [TB, C], <= 1
        denom = jnp.sum(e, axis=1, keepdims=True)            # [TB, 1]

        # --- student_features = softmax(student/T) @ anchors (MXU) ---
        # Row normalization commutes with the linear map -> normalize after.
        if use_bf16_matmul:
            feats_un = jnp.dot(e.astype(jnp.bfloat16), anchors_ref[...],
                               preferred_element_type=jnp.float32)
        else:
            feats_un = jnp.dot(e, anchors_ref[...].astype(jnp.float32),
                               preferred_element_type=jnp.float32)
        feats = feats_un / denom                              # [TB, C]

        # --- log_softmax(feats / T), folded against the teacher weights ---
        f = feats * inv_t
        f_max = jnp.max(f, axis=1, keepdims=True)
        lse = jnp.log(jnp.sum(jnp.exp(f - f_max), axis=1, keepdims=True)) + f_max

        t = teacher_ref[...].astype(jnp.float32)
        t_sum = jnp.sum(t, axis=1, keepdims=True)             # [TB, 1]
        t_dot_f = jnp.sum(t * f, axis=1, keepdims=True)       # [TB, 1]

        # per-row loss: -sum_c t*(f - lse) == lse * sum_c t - sum_c t*f
        loss_rows = lse * t_sum - t_dot_f                     # [TB, 1]

        # Mask tail rows of the (possibly ragged) last block.  Row-wise math
        # keeps garbage rows isolated, and jnp.where selects 0.0 even if the
        # garbage produced NaN/Inf for those rows.
        row_ids = (jax.lax.broadcasted_iota(jnp.int32, loss_rows.shape, 0)
                   + i * tile_rows)
        loss_rows = jnp.where(row_ids < batch, loss_rows, 0.0)

        # Per-tile scalar written to a lane-dense, 128-aligned block
        # (scalar in lane 0, zeros elsewhere) -> unmasked aligned vst.
        tile_sum = jnp.sum(loss_rows, axis=0, keepdims=True)  # [1, 1]
        lane = jax.lax.broadcasted_iota(jnp.int32, (1, 128), 1)
        out_ref[...] = jnp.where(lane == 0, tile_sum, 0.0)    # [1, 128]

    return kernel


def _round_up(x, m):
    return ((x + m - 1) // m) * m


def _cdiv(a, b):
    return (a + b - 1) // b


def _pick_tiles(B, C, input_itemsize):
    """Pick (TB, num_tiles): num_tiles first, then TB = round_up(cdiv(B, nt), 8)."""
    # Double-buffered streamed inputs: 2 tensors x 2 buffers x TB x C x itemsize.
    budget = 16 << 20                       # keep pipelined working set v7x-safe
    per_row = 2 * 2 * C * max(1, int(input_itemsize))
    tb_cap = max(8, min(2048, budget // per_row))
    tb_cap = max(8, (tb_cap // 8) * 8)

    if B <= tb_cap:
        # >=2 tiles lets the "parallel" batch axis shard over both v7x TCs.
        num_tiles = 2 if B >= 64 else 1
    else:
        num_tiles = _cdiv(B, tb_cap)
    if num_tiles > 1 and num_tiles % 2 == 1:
        num_tiles += 1                      # even tile count balances the two cores

    TB = _round_up(_cdiv(B, num_tiles), 8)
    num_tiles = _cdiv(B, TB)
    return TB, num_tiles


def anchor_distillation_loss(student_outputs, teacher_outputs, anchors,
                             temperature=1.0, use_bf16_matmul=True):
    B, C = student_outputs.shape
    assert teacher_outputs.shape == (B, C)
    # TODO(synk): the module's adjust_anchors / dim-mismatch path applies a
    # freshly-initialized (untrained, random) nn.Linear; not replicated here —
    # anchors must already be [num_classes, num_classes].
    assert anchors.shape == (C, C)

    # Anchors are tiny and read once per call: casting in the wrapper halves
    # their HBM read + resident VMEM when the bf16 MXU path is enabled.
    anchors_mx = anchors.astype(jnp.bfloat16 if use_bf16_matmul else jnp.float32)
    # TODO(synk): for very large C (C^2 no longer VMEM-resident, C >~ 1400 on
    # v7x) switch to a K/N-tiled anchors inner pipeline (pltpu.emit_pipeline).

    input_itemsize = student_outputs.dtype.itemsize
    TB, num_tiles = _pick_tiles(B, C, input_itemsize)

    kernel = _make_kernel(1.0 / float(temperature), TB, B, use_bf16_matmul)

    per_tile = pl.pallas_call(
        kernel,
        out_shape=jax.ShapeDtypeStruct((1, num_tiles * 128), jnp.float32),
        grid_spec=pltpu.PrefetchScalarGridSpec(
            num_scalar_prefetch=0,
            grid=(num_tiles,),
            in_specs=[
                pl.BlockSpec((TB, C), lambda i: (i, 0)),   # student tile (ragged tail ok)
                pl.BlockSpec((TB, C), lambda i: (i, 0)),   # teacher tile
                pl.BlockSpec((C, C), lambda i: (0, 0)),    # anchors: resident, fetched once
            ],
            out_specs=pl.BlockSpec((1, 128), lambda i: (0, i)),  # lane-dense per-tile scalar
        ),
        compiler_params=pltpu.CompilerParams(
            dimension_semantics=("parallel",),
            # Covers v5e's 16 MiB scoped default; well below v7x's 64 MiB physical.
            vmem_limit_bytes=40 * 1024 * 1024,
        ),
        cost_estimate=pl.CostEstimate(
            flops=2 * B * C * C,
            transcendentals=2 * B * C,
            bytes_accessed=(2 * B * C * input_itemsize
                            + C * C * anchors_mx.dtype.itemsize
                            + 4 * num_tiles * 128),
        ),
    )(student_outputs, teacher_outputs, anchors_mx)

    # Masked/empty lanes are exactly zero, so a full sum is exact.
    return jnp.sum(per_tile) / B


def _reference(student_outputs, teacher_outputs, anchors, temperature=1.0):
    # pure-JAX reference for sanity checking
    p = jax.nn.softmax(student_outputs / temperature, axis=1)
    f = p @ anchors
    log_sm = jax.nn.log_softmax(f / temperature, axis=1)
    return jnp.mean(-jnp.sum(teacher_outputs * log_sm, axis=1))


if __name__ == "__main__":
    def run_case(B, C, key, use_bf16_matmul, rtol, atol, temperature=1.0):
        k_s, k_t, k_a = jax.random.split(key, 3)
        student = jax.random.normal(k_s, (B, C), dtype=jnp.float32)
        # teacher_outputs are soft targets; make them probability-like (the
        # module itself does not normalize them).
        teacher = jax.nn.softmax(
            jax.random.normal(k_t, (B, C), dtype=jnp.float32), axis=1)
        anchors = jax.random.normal(k_a, (C, C), dtype=jnp.float32) * 0.1

        loss = jax.block_until_ready(
            anchor_distillation_loss(student, teacher, anchors,
                                     temperature=temperature,
                                     use_bf16_matmul=use_bf16_matmul))
        ref = _reference(student, teacher, anchors, temperature)
        assert jnp.isfinite(loss), (B, C, float(loss))
        assert jnp.allclose(loss, ref, rtol=rtol, atol=atol), \
            (B, C, use_bf16_matmul, float(loss), float(ref))

    key = jax.random.PRNGKey(0)
    k1, k2, k3 = jax.random.split(key, 3)

    # small single-tile case, exact f32 MXU path
    run_case(8, 128, k1, use_bf16_matmul=False, rtol=1e-4, atol=1e-5)
    # multi-tile, ragged last block, in-kernel masking, bf16 MXU path (default)
    run_case(300, 128, k2, use_bf16_matmul=True, rtol=1e-2, atol=1e-2)
    # multi-tile f32 path with non-unit temperature
    run_case(300, 128, k3, use_bf16_matmul=False, rtol=1e-4, atol=1e-5,
             temperature=2.0)

    print("KERNEL_OK")
</pallas_src>

<mosaic_0001>
module attributes {stable_mosaic.version = 11 : i64} {
  func.func @kernel(%arg0: i32, %arg1: memref<8x128xf32, #tpu.memory_space<vmem>>, %arg2: memref<8x128xf32, #tpu.memory_space<vmem>>, %arg3: memref<128x128xf32, #tpu.memory_space<vmem>>, %arg4: memref<1x128xf32, #tpu.memory_space<vmem>>) attributes {dimension_semantics = [#tpu.dimension_semantics<parallel>], iteration_bounds = array<i64: 1>, scalar_prefetch = 0 : i64, scratch_operands = 0 : i64, tpu.core_type = #tpu.core_type<tc>, window_params = [{transform_indices = @transform_0, window_bounds = array<i64: 8, 128>}, {transform_indices = @transform_1, window_bounds = array<i64: 8, 128>}, {pipeline_mode = #tpu.pipeline_mode<synchronous>, transform_indices = @transform_2, window_bounds = array<i64: 128, 128>}, {transform_indices = @transform_3, window_bounds = array<i64: 1, 128>}]} {
    %c0 = arith.constant 0 : index
    %c0_0 = arith.constant 0 : index
    %0 = vector.load %arg1[%c0, %c0_0] : memref<8x128xf32, #tpu.memory_space<vmem>>, vector<8x128xf32>
    %cst = arith.constant 1.000000e+00 : f32
    %1 = vector.broadcast %cst : f32 to vector<8x128xf32>
    %2 = arith.mulf %0, %1 : vector<8x128xf32>
    %cst_1 = arith.constant dense<0xFF800000> : vector<8xf32>
    %3 = vector.multi_reduction <maximumf>, %2, %cst_1 [1] : vector<8x128xf32> to vector<8xf32>
    %4 = vector.shape_cast %3 : vector<8xf32> to vector<8x1xf32>
    %5 = vector.broadcast %4 : vector<8x1xf32> to vector<8x128xf32>
    %6 = arith.subf %2, %5 : vector<8x128xf32>
    %7 = math.exp %6 : vector<8x128xf32>
    %cst_2 = arith.constant dense<0.000000e+00> : vector<8xf32>
    %8 = vector.multi_reduction <add>, %7, %cst_2 [1] : vector<8x128xf32> to vector<8xf32>
    %9 = vector.shape_cast %8 : vector<8xf32> to vector<8x1xf32>
    %c0_3 = arith.constant 0 : index
    %c0_4 = arith.constant 0 : index
    %10 = vector.load %arg3[%c0_3, %c0_4] : memref<128x128xf32, #tpu.memory_space<vmem>>, vector<128x128xf32>
    %cst_5 = arith.constant dense<0.000000e+00> : vector<8x128xf32>
    %11 = tpu.matmul %7, %10, %cst_5 {dimension_numbers = #tpu.dot_dimension_numbers<[1], [0], [0], [1], [0, 0, 1, 1], [], []>} : vector<8x128xf32>, vector<128x128xf32>, vector<8x128xf32> -> vector<8x128xf32>
    %12 = vector.broadcast %9 : vector<8x1xf32> to vector<8x128xf32>
    %13 = arith.divf %11, %12 : vector<8x128xf32>
    %cst_6 = arith.constant 1.000000e+00 : f32
    %14 = vector.broadcast %cst_6 : f32 to vector<8x128xf32>
    %15 = arith.mulf %13, %14 : vector<8x128xf32>
    %cst_7 = arith.constant dense<0xFF800000> : vector<8xf32>
    %16 = vector.multi_reduction <maximumf>, %15, %cst_7 [1] : vector<8x128xf32> to vector<8xf32>
    %17 = vector.shape_cast %16 : vector<8xf32> to vector<8x1xf32>
    %18 = vector.broadcast %17 : vector<8x1xf32> to vector<8x128xf32>
    %19 = arith.subf %15, %18 : vector<8x128xf32>
    %20 = math.exp %19 : vector<8x128xf32>
    %cst_8 = arith.constant dense<0.000000e+00> : vector<8xf32>
    %21 = vector.multi_reduction <add>, %20, %cst_8 [1] : vector<8x128xf32> to vector<8xf32>
    %22 = vector.shape_cast %21 : vector<8xf32> to vector<8x1xf32>
    %23 = math.log %22 : vector<8x1xf32>
    %24 = arith.addf %23, %17 : vector<8x1xf32>
    %c0_9 = arith.constant 0 : index
    %c0_10 = arith.constant 0 : index
    %25 = vector.load %arg2[%c0_9, %c0_10] : memref<8x128xf32, #tpu.memory_space<vmem>>, vector<8x128xf32>
    %cst_11 = arith.constant dense<0.000000e+00> : vector<8xf32>
    %26 = vector.multi_reduction <add>, %25, %cst_11 [1] : vector<8x128xf32> to vector<8xf32>
    %27 = vector.shape_cast %26 : vector<8xf32> to vector<8x1xf32>
    %28 = arith.mulf %25, %15 : vector<8x128xf32>
    %cst_12 = arith.constant dense<0.000000e+00> : vector<8xf32>
    %29 = vector.multi_reduction <add>, %28, %cst_12 [1] : vector<8x128xf32> to vector<8xf32>
    %30 = vector.shape_cast %29 : vector<8xf32> to vector<8x1xf32>
    %31 = arith.mulf %24, %27 : vector<8x1xf32>
    %32 = arith.subf %31, %30 : vector<8x1xf32>
    %33 = tpu.iota {dimensions = array<i32: 0>} : vector<8x1xi32>
    %c8_i32 = arith.constant 8 : i32
    %34 = arith.muli %arg0, %c8_i32 : i32
    %35 = vector.broadcast %34 : i32 to vector<8x1xi32>
    %36 = arith.addi %33, %35 : vector<8x1xi32>
    %c8_i32_13 = arith.constant 8 : i32
    %37 = vector.broadcast %c8_i32_13 : i32 to vector<8x1xi32>
    %38 = arith.cmpi slt, %36, %37 : vector<8x1xi32>
    %cst_14 = arith.constant 0.000000e+00 : f32
    %39 = vector.broadcast %cst_14 : f32 to vector<8x1xf32>
    %40 = arith.select %38, %32, %39 : vector<8x1xi1>, vector<8x1xf32>
    %cst_15 = arith.constant dense<0.000000e+00> : vector<1xf32>
    %41 = vector.multi_reduction <add>, %40, %cst_15 [0] : vector<8x1xf32> to vector<1xf32>
    %42 = vector.shape_cast %41 : vector<1xf32> to vector<1x1xf32>
    %43 = tpu.iota {dimensions = array<i32: 1>} : vector<1x128xi32>
    %c0_i32 = arith.constant 0 : i32
    %44 = vector.broadcast %c0_i32 : i32 to vector<1x128xi32>
    %45 = arith.cmpi eq, %43, %44 : vector<1x128xi32>
    %cst_16 = arith.constant 0.000000e+00 : f32
    %46 = vector.shape_cast %42 : vector<1x1xf32> to vector<1x1xf32>
    %47 = vector.broadcast %46 : vector<1x1xf32> to vector<1x128xf32>
    %48 = vector.broadcast %cst_16 : f32 to vector<1x128xf32>
    %49 = arith.select %45, %47, %48 : vector<1x128xi1>, vector<1x128xf32>
    %c0_17 = arith.constant 0 : index
    %c0_18 = arith.constant 0 : index
    %50 = vector.load %arg4[%c0_17, %c0_18] : memref<1x128xf32, #tpu.memory_space<vmem>>, vector<1x128xf32>
    tpu.vector_store %arg4[%c0_17, %c0_18], %49 {strides = array<i32>} : memref<1x128xf32, #tpu.memory_space<vmem>>, vector<1x128xf32>,
    return
  }
  func.func @transform_0(%arg0: i32) -> (i32, i32) {
    %c0_i32 = arith.constant 0 : i32
    %c0_i32_0 = arith.constant 0 : i32
    return %arg0, %c0_i32 : i32, i32
  }
  func.func @transform_1(%arg0: i32) -> (i32, i32) {
    %c0_i32 = arith.constant 0 : i32
    %c0_i32_0 = arith.constant 0 : i32
    return %arg0, %c0_i32 : i32, i32
  }
  func.func @transform_2(%arg0: i32) -> (i32, i32) {
    %c0_i32 = arith.constant 0 : i32
    %c0_i32_0 = arith.constant 0 : i32
    %c0_i32_1 = arith.constant 0 : i32
    return %c0_i32, %c0_i32_0 : i32, i32
  }
  func.func @transform_3(%arg0: i32) -> (i32, i32) {
    %c0_i32 = arith.constant 0 : i32
    %c0_i32_0 = arith.constant 0 : i32
    return %c0_i32, %arg0 : i32, i32
  }
}

</mosaic_0001>

<llo_original>
// kernel: tpu_custom_call.1
$region0: #{tpu_custom_call.1}
  #allocation0 [shape = 'u32[]', space=smem, size = 0x4, offset = 0x4, fixed_abs, tag = 'smem constant byte address 0x4 - core index']
  #allocation1 [shape = 'u32[144,128]{1,0:T(1,128)}', space=vmem, size = 0x12000, scoped, tag = 'internal scratch']
  %s0 = inlined_call_operand.hbm [shape: f32[8,128], index: 0, kind: input, shape index: {}]
  %s1 = inlined_call_operand.hbm [shape: f32[8,128], index: 1, kind: input, shape index: {}]
  %s2 = inlined_call_operand.hbm [shape: f32[128,128], index: 2, kind: input, shape index: {}]
  %s3 = inlined_call_operand.hbm [shape: f32[1,128], index: 3, kind: output, shape index: {}]
  %s4 = sld [smem:[#allocation0]]
  $region34: #{tpu_custom_call.1} parent=0
    _
  %s6 = ssub.s32 1, %s4
  %s7 = scalar_select 0, %s6, %s4
  $region1: #{tpu_custom_call.1} parent=0
    #allocation2 [shape = 'u8[4096]{0}', space=vmem, size = 0x1000, scoped, tag = 'input window, operand 0, single buffered']
    #allocation3 [shape = 's32[1]{0}', space=sflag, size = 0x4, scoped, tag = 'scoped memory for tpu_custom_call.1']
    #allocation4 [shape = 's32[1]{0}', space=sflag, size = 0x4, scoped, tag = 'scoped memory for tpu_custom_call.1']
    #allocation5 [shape = 'u8[4096]{0}', space=vmem, size = 0x1000, scoped, tag = 'input window, operand 1, single buffered']
    #allocation6 [shape = 's32[1]{0}', space=sflag, size = 0x4, scoped, tag = 'scoped memory for tpu_custom_call.1']
    #allocation7 [shape = 'u8[65536]{0}', space=vmem, size = 0x10000, scoped, tag = 'input window, operand 2, single buffered']
    #allocation8 [shape = 'u8[512]{0}', space=vmem, size = 0x400, scoped, tag = 'output window, operand 0, single buffered']
    %8 = vsyncpa [#allocation3], 0
    %9 = vsyncpa [#allocation6], 0
    %10 = vsyncpa [#allocation4], 0
    // Predicated region
    $region2: #{tpu_custom_call.1} parent=1 // pred_check
      _
    $region3: #{tpu_custom_call.1} parent=1 // pred_check_branch
      %12 = sbr.rel (0) target = $region5
    $region4: #{tpu_custom_call.1} parent=1 // pred_region
      %s14 = ssub.s32 128, 128
      %15 = vsyncadd [#allocation3], %s14
      %s17 = sshll.u32 [#allocation2], 4
      %s18 = int_to_ptr.vmem [resolvable:$true] %s17
      %20 = dma.hbm_to_vmem [thread:$0]  %s0, 128, %s18, [#allocation3]
    $region5: #{tpu_custom_call.1} parent=1 // pred_fallthru
      _
    // Predicated region
    $region6: #{tpu_custom_call.1} parent=1 // pred_check
      _
    $region7: #{tpu_custom_call.1} parent=1 // pred_check_branch
      %22 = sbr.rel (0) target = $region9
    $region8: #{tpu_custom_call.1} parent=1 // pred_region
      %s24 = ssub.s32 128, 128
      %25 = vsyncadd [#allocation6], %s24
      %s27 = sshll.u32 [#allocation5], 4
      %s28 = int_to_ptr.vmem [resolvable:$true] %s27
      %30 = dma.hbm_to_vmem [thread:$0]  %s1, 128, %s28, [#allocation6]
    $region9: #{tpu_custom_call.1} parent=1 // pred_fallthru
      _
    // Predicated region
    $region10: #{tpu_custom_call.1} parent=1 // pred_check
      _
    $region11: #{tpu_custom_call.1} parent=1 // pred_check_branch
      %32 = sbr.rel (0) target = $region13
    $region12: #{tpu_custom_call.1} parent=1 // pred_region
      %s34 = ssub.s32 2048, 2048
      %35 = vsyncadd [#allocation6], %s34
      %s36 = sshll.u32 [#allocation7], 4
      %s37 = int_to_ptr.vmem [resolvable:$true] %s36
      %42 = dma.hbm_to_vmem [thread:$0]  %s2, 2048, %s37, [#allocation6], 128, 128, 8
    $region13: #{tpu_custom_call.1} parent=1 // pred_fallthru
      _
    // Predicated region
    $region14: #{tpu_custom_call.1} parent=1 // pred_check
      _
    $region15: #{tpu_custom_call.1} parent=1 // pred_check_branch
      %44 = sbr.rel (0) target = $region17
    $region16: #{tpu_custom_call.1} parent=1 // pred_region
      %45 = dma.done [#allocation3], 128
    $region17: #{tpu_custom_call.1} parent=1 // pred_fallthru
      _
    // Predicated region
    $region18: #{tpu_custom_call.1} parent=1 // pred_check
      _
    $region19: #{tpu_custom_call.1} parent=1 // pred_check_branch
      %47 = sbr.rel (0) target = $region21
    $region20: #{tpu_custom_call.1} parent=1 // pred_region
      %48 = dma.done [#allocation6], 128
    $region21: #{tpu_custom_call.1} parent=1 // pred_fallthru
      _
    // Predicated region
    $region22: #{tpu_custom_call.1} parent=1 // pred_check
      _
    $region23: #{tpu_custom_call.1} parent=1 // pred_check_branch
      %50 = sbr.rel (0) target = $region25
    $region24: #{tpu_custom_call.1} parent=1 // pred_region
      %51 = dma.done [#allocation6], 2048
    $region25: #{tpu_custom_call.1} parent=1 // pred_fallthru
      _
    %v52 = vld [vmem:[#allocation2] sm:$0xff]
    %53 = vmax.xlane.f32.xlu0 %v52
    %v54 = vpop.xlane.xlu0 %53
    %v55 = vsub.f32 %v52, %v54
    %v56 = vmul.f32 %v55, 1.442695
    %v57 = vpow.pop %v56
    %58 = vadd.xlane.f32.xlu0 %v57
    %v59 = vpop.xlane.xlu0 %58
    %v60 = vld [vmem:[#allocation7] sm:$0xff]
    %v61 = vld [vmem:[#allocation7 + $0x8] sm:$0xff]
    %v62 = vld [vmem:[#allocation7 + $0x10] sm:$0xff]
    %v63 = vld [vmem:[#allocation7 + $0x18] sm:$0xff]
    %v64 = vld [vmem:[#allocation7 + $0x20] sm:$0xff]
    %v65 = vld [vmem:[#allocation7 + $0x28] sm:$0xff]
    %v66 = vld [vmem:[#allocation7 + $0x30] sm:$0xff]
    %v67 = vld [vmem:[#allocation7 + $0x38] sm:$0xff]
    %v68 = vld [vmem:[#allocation7 + $0x40] sm:$0xff]
    %v69 = vld [vmem:[#allocation7 + $0x48] sm:$0xff]
    %v70 = vld [vmem:[#allocation7 + $0x50] sm:$0xff]
    %v71 = vld [vmem:[#allocation7 + $0x58] sm:$0xff]
    %v72 = vld [vmem:[#allocation7 + $0x60] sm:$0xff]
    %v73 = vld [vmem:[#allocation7 + $0x68] sm:$0xff]
    %v74 = vld [vmem:[#allocation7 + $0x70] sm:$0xff]
    %v75 = vld [vmem:[#allocation7 + $0x78] sm:$0xff]
    %76 = vmatprep.subr.mxu0 0.0
    %77 = vmatpush1.msra.mxu0 %v60
    %78 = vmatprep.subr.mxu0 0.0
    %79 = vmatpush1.msra.mxu0 %v61
    %80 = vmatprep.subr.mxu0 0.0
    %81 = vmatpush1.msra.mxu0 %v62
    %82 = vmatprep.subr.mxu0 0.0
    %83 = vmatpush1.msra.mxu0 %v63
    %84 = vmatprep.subr.mxu0 0.0
    %85 = vmatpush1.msra.mxu0 %v64
    %86 = vmatprep.subr.mxu0 0.0
    %87 = vmatpush1.msra.mxu0 %v65
    %88 = vmatprep.subr.mxu0 0.0
    %89 = vmatpush1.msra.mxu0 %v66
    %90 = vmatprep.subr.mxu0 0.0
    %91 = vmatpush1.msra.mxu0 %v67
    %92 = vmatprep.subr.mxu0 0.0
    %93 = vmatpush1.msra.mxu0 %v68
    %94 = vmatprep.subr.mxu0 0.0
    %95 = vmatpush1.msra.mxu0 %v69
    %96 = vmatprep.subr.mxu0 0.0
    %97 = vmatpush1.msra.mxu0 %v70
    %98 = vmatprep.subr.mxu0 0.0
    %99 = vmatpush1.msra.mxu0 %v71
    %100 = vmatprep.subr.mxu0 0.0
    %101 = vmatpush1.msra.mxu0 %v72
    %102 = vmatprep.subr.mxu0 0.0
    %103 = vmatpush1.msra.mxu0 %v73
    %104 = vmatprep.subr.mxu0 0.0
    %105 = vmatpush1.msra.mxu0 %v74
    %106 = vmatprep.subr.mxu0 0.0
    %107 = vmatpush1.msra.mxu0 %v75
    %108 = vmatprep.subr.mxu0 0.0
    %109 = vmatpush1.msra.mxu0 0.0
    %110 = vmatprep.subr.mxu0 0.0
    %111 = vmatpush1.msra.mxu0 0.0
    %112 = vmatprep.subr.mxu0 0.0
    %113 = vmatpush1.msra.mxu0 0.0
    %114 = vmatprep.subr.mxu0 0.0
    %115 = vmatpush1.msra.mxu0 0.0
    %116 = vmatprep.subr.mxu0 0.0
    %117 = vmatpush1.msra.mxu0 0.0
    %118 = vmatprep.subr.mxu0 0.0
    %119 = vmatpush1.msra.mxu0 0.0
    %120 = vmatprep.subr.mxu0 0.0
    %121 = vmatpush1.msra.mxu0 0.0
    %122 = vmatprep.subr.mxu0 0.0
    %123 = vmatpush1.msra.mxu0 0.0
    %124 = vmatprep.subr.mxu0 0.0
    %125 = vmatpush1.msra.mxu0 0.0
    %126 = vmatprep.subr.mxu0 0.0
    %127 = vmatpush1.msra.mxu0 0.0
    %128 = vmatprep.subr.mxu0 0.0
    %129 = vmatpush1.msra.mxu0 0.0
    %130 = vmatprep.subr.mxu0 0.0
    %131 = vmatpush1.msra.mxu0 0.0
    %132 = vmatprep.subr.mxu0 0.0
    %133 = vmatpush1.msra.mxu0 0.0
    %134 = vmatprep.subr.mxu0 0.0
    %135 = vmatpush1.msra.mxu0 0.0
    %136 = vmatprep.subr.mxu0 0.0
    %137 = vmatpush1.msra.mxu0 0.0
    %138 = vmatprep.subr.mxu0 0.0
    %139 = vmatpush1.msra.mxu0 0.0
    %140 = vmatprep.mubr.f32.mxu0 0.0
    %141 = vmatmul.mubr.f32.gmra.mrb[0].mxu0 %v57
    %v142 = vpop.f32.mrb[0].mxu0
    %v143 = vadd.f32 0.0, %v142
    %v144 = vpop.f32.mrb[0].mxu0
    %145 = vdwg.mxu0
    %v146 = vrcp.pop %v59
    %v147 = vmul.f32 %v143, %v146
    %148 = vmax.xlane.f32.xlu0 %v147
    %v149 = vpop.xlane.xlu0 %148
    %v150 = vsub.f32 %v147, %v149
    %v151 = vmul.f32 %v150, 1.442695
    %v152 = vpow.pop %v151
    %153 = vadd.xlane.f32.xlu0 %v152
    %v154 = vpop.xlane.xlu0 %153
    %v155 = vlog2.pop %v154
    %v156 = vmul.f32 %v155, 0.6931472
    %v157 = vadd.f32 %v156, %v149
    %v158 = vld [vmem:[#allocation5] sm:$0xff]
    %159 = vadd.xlane.f32.xlu0 %v158
    %v160 = vpop.xlane.xlu0 %159
    %v161 = vmul.f32 %v158, %v147
    %162 = vadd.xlane.f32.xlu0 %v161
    %v163 = vpop.xlane.xlu0 %162
    %v164 = vmul.f32 %v157, %v160
    %v165 = vsub.f32 %v164, %v163
    %v166 = vlaneseq
    %v167 = vshrl.u32 %v166, 7
    %s168 = smul.u32 0, 8
    %v169 = vstv %s168
    %v170 = vadd.s32 %v167, %v169
    %vm171 = vcmp.lt.s32.totalorder %v170, 8
    %v172 = vsel %vm171, %v165, 0.0
    %v173 = vrot.slane %v172, 4
    %v174 = vadd.f32 %v172, %v173
    %v175 = vrot.slane %v174, 2
    %v176 = vadd.f32 %v174, %v175
    %v177 = vrot.slane %v176, 1
    %v178 = vadd.f32 %v176, %v177
    %v179 = vlaneseq
    %v180 = vand.u32 %v179, 127
    %vm181 = vcmp.eq.s32.totalorder %v180, 0
    %v182 = vsel %vm181, %v178, 0.0
    %183 = vst [vmem:[#allocation8] sm:$0x1] %v182
    // Predicated region
    $region26: #{tpu_custom_call.1} parent=1 // pred_check
      _
    $region27: #{tpu_custom_call.1} parent=1 // pred_check_branch
      %185 = sbr.rel (0) target = $region29
    $region28: #{tpu_custom_call.1} parent=1 // pred_region
      %s187 = ssub.s32 16, 16
      %188 = vsyncadd [#allocation4], %s187
      %s190 = sshll.u32 [#allocation8], 4
      %s191 = int_to_ptr.vmem [resolvable:$true] %s190
      %193 = dma.vmem_to_hbm [thread:$0]  %s191, 16, %s3, [#allocation4]
    $region29: #{tpu_custom_call.1} parent=1 // pred_fallthru
      _
    // Predicated region
    $region30: #{tpu_custom_call.1} parent=1 // pred_check
      _
    $region31: #{tpu_custom_call.1} parent=1 // pred_check_branch
      %195 = sbr.rel (0) target = $region33
    $region32: #{tpu_custom_call.1} parent=1 // pred_region
      %196 = dma.done [#allocation4], 16
    $region33: #{tpu_custom_call.1} parent=1 // pred_fallthru
      _
    %197 = vsyncpa [#allocation3], 1
    %198 = vsyncpa [#allocation6], 1
    %199 = vsyncpa [#allocation4], 1

</llo_original>
